<compile_context>
chip_gen: v6e
topology: v6e:2x2x1
jax: 0.10.0
libtpu: 0.0.40
codegen_flags: <defaults>
</compile_context>

<pallas_src>
import functools
import math

import jax
import jax.numpy as jnp
from jax.experimental import pallas as pl
from jax.experimental.pallas import tpu as pltpu


def _sdpa_kernel(q_ref, k_ref, v_ref, mask_ref, ctx_ref, attn_ref, *, scale_inv):
    # q_ref:    (H, tq, d_k)        queries of one batch (all heads), one query tile
    # k_ref:    (H, Sk, d_k)        keys of that batch (resident across query tiles)
    # v_ref:    (H, Sk, d_v)        values of that batch
    # mask_ref: (mH, mq, Sk) int8   nonzero = masked out; mH in {1,H}, mq in {1,tq}
    # ctx_ref:  (tq, H*d_v)         lane-dense packed context
    # attn_ref: (H, tq, Sk)         attention probabilities
    n_heads, _, d_v = v_ref.shape

    # Fold 1/sqrt(d_k) into Q; keep the native dtype so bf16 inputs hit the bf16 MXU
    # rate, and accumulate the scores in f32.
    q = q_ref[...] * scale_inv
    s = jnp.einsum("hqd,hkd->hqk", q, k_ref[...],
                   preferred_element_type=jnp.float32)            # (H, tq, Sk) f32

    m = mask_ref[...]                                             # broadcasts to (H, tq, Sk)
    s = jnp.where(m != 0, jnp.float32(-1e9), s)

    # Numerically stable softmax along the key axis; one reciprocal per row on the EUP
    # plus a cheap multiply instead of a full (tq, Sk) divide.
    s_max = jnp.max(s, axis=-1, keepdims=True)
    p = jnp.exp(s - s_max)
    denom = jnp.sum(p, axis=-1, keepdims=True)
    inv = pl.reciprocal(denom, approx=False)   # approx=True trades ~1e-3 rel err for speed
    attn = p * inv

    attn_ref[...] = attn.astype(attn_ref.dtype)

    # Per-head P @ V on the MXU, packed into the lane-dense (tq, H*d_v) output block.
    # The narrow per-head column stores only touch VMEM; the HBM writeback is dense.
    attn_v = attn.astype(v_ref.dtype)
    for h in range(n_heads):
        ctx_h = jnp.dot(attn_v[h], v_ref[h], preferred_element_type=jnp.float32)
        ctx_ref[:, h * d_v:(h + 1) * d_v] = ctx_h.astype(ctx_ref.dtype)


def _pick_tile_q(Sq, Sk, H, Dk, Dv, itemsize, mask_sq, mask_h):
    """Largest query tile whose per-step working set fits a conservative VMEM budget."""
    def est(tq):
        mq = tq if mask_sq > 1 else 1
        one_buf = (H * tq * Dk + H * Sk * (Dk + Dv) + tq * H * Dv
                   + H * tq * Sk) * itemsize + mask_h * mq * Sk      # int8 mask stream
        interm = 2 * H * tq * Sk * 4                                 # f32 scores + probs
        return 2 * one_buf + interm                                  # double-buffered

    budget = 20 * 2 ** 20
    cands = [Sq] + [t for t in (1024, 512, 256, 128, 64, 32) if t < Sq and Sq % t == 0]
    for t in cands:
        if est(t) <= budget:
            return t, est(t)
    return cands[-1], est(cands[-1])


def scaled_dot_product_attention(Q, K, V, attn_mask, *, attn_dtype=None):
    """Q, K: (B, H, S_q, d_k) / (B, H, S_k, d_k); V: (B, H, S_k, d_v).
    attn_mask: bool/int, broadcastable to (B, H, S_q, S_k); True/nonzero = masked out.
    Returns (context (B,H,S_q,d_v), attn (B,H,S_q,S_k)) like the PyTorch module."""
    B, H, Sq, Dk = Q.shape
    Sk, Dv = V.shape[-2], V.shape[-1]
    out_dtype = Q.dtype
    attn_dtype = out_dtype if attn_dtype is None else jnp.dtype(attn_dtype)

    # --- mask: keep the broadcastable shape and stream it as int8 ----------------
    mask = jnp.asarray(attn_mask)
    while mask.ndim < 4:
        mask = mask[None]
    mB, mH, mSq, mSk = mask.shape
    if mB not in (1, B) or mH not in (1, H) or mSq not in (1, Sq) or mSk != Sk:
        mask = jnp.broadcast_to(mask, (B, H, Sq, Sk))
        mB, mH, mSq, mSk = mask.shape
    mask = (mask != 0).astype(jnp.int8)

    # --- VMEM-budgeted query tile --------------------------------------------------
    itemsize = jnp.dtype(out_dtype).itemsize
    tile_q, est_bytes = _pick_tile_q(Sq, Sk, H, Dk, Dv, itemsize, mSq, mH)
    assert Sq % tile_q == 0
    n_q = Sq // tile_q
    mq_blk = tile_q if mSq == Sq else 1
    vmem_limit = int(min(96 * 2 ** 20, max(48 * 2 ** 20, est_bytes * 3 // 2)))

    kernel = functools.partial(_sdpa_kernel, scale_inv=1.0 / math.sqrt(Dk))

    cost = pl.CostEstimate(
        flops=2 * B * H * Sq * Sk * (Dk + Dv),
        transcendentals=B * H * Sq * Sk,
        bytes_accessed=(Q.size + K.size + V.size) * itemsize
        + mask.size                                                    # int8
        + B * Sq * H * Dv * itemsize
        + B * H * Sq * Sk * jnp.dtype(attn_dtype).itemsize,
    )

    def mask_index_map(b, i):
        return (b if mB == B else 0, 0, i if mSq == Sq else 0, 0)

    grid_spec = pltpu.PrefetchScalarGridSpec(
        num_scalar_prefetch=0,
        grid=(B, n_q),
        in_specs=[
            pl.BlockSpec((pl.Squeezed(), H, tile_q, Dk), lambda b, i: (b, 0, i, 0)),  # Q tile
            pl.BlockSpec((pl.Squeezed(), H, Sk, Dk), lambda b, i: (b, 0, 0, 0)),      # K (resident)
            pl.BlockSpec((pl.Squeezed(), H, Sk, Dv), lambda b, i: (b, 0, 0, 0)),      # V (resident)
            pl.BlockSpec((pl.Squeezed(), mH, mq_blk, Sk), mask_index_map),            # mask (int8)
        ],
        out_specs=[
            pl.BlockSpec((pl.Squeezed(), tile_q, H * Dv), lambda b, i: (b, i, 0)),    # ctx packed
            pl.BlockSpec((pl.Squeezed(), H, tile_q, Sk), lambda b, i: (b, 0, i, 0)),  # attn
        ],
    )

    ctx_packed, attn = pl.pallas_call(
        kernel,
        out_shape=(
            jax.ShapeDtypeStruct((B, Sq, H * Dv), out_dtype),   # lane-dense context
            jax.ShapeDtypeStruct((B, H, Sq, Sk), attn_dtype),   # attention probabilities
        ),
        grid_spec=grid_spec,
        compiler_params=pltpu.CompilerParams(
            dimension_semantics=("parallel", "parallel"),
            vmem_limit_bytes=vmem_limit),
        cost_estimate=cost,
    )(Q, K, V, mask)

    # Unpack (B, Sq, H*Dv) -> (B, H, Sq, Dv); pure layout plumbing outside the kernel.
    ctx = ctx_packed.reshape(B, Sq, H, Dv).transpose(0, 2, 1, 3)
    return ctx, attn


if __name__ == "__main__":
    # Small shapes consistent with the module: batch=2, heads=2, seq=8, d_k=d_v=32.
    B, H, S, Dk, Dv = 2, 2, 8, 32, 32

    key = jax.random.PRNGKey(0)
    kq, kk, kv, km = jax.random.split(key, 4)
    Q = jax.random.normal(kq, (B, H, S, Dk), dtype=jnp.float32)
    K = jax.random.normal(kk, (B, H, S, Dk), dtype=jnp.float32)
    V = jax.random.normal(kv, (B, H, S, Dv), dtype=jnp.float32)
    attn_mask = jax.random.bernoulli(km, 0.25, (B, H, S, S))  # True = masked out

    ctx, attn = scaled_dot_product_attention(Q, K, V, attn_mask)
    jax.block_until_ready((ctx, attn))

    # Pure-JAX reference (mirrors the PyTorch forward).
    scale_inv = 1.0 / math.sqrt(Dk)
    scores = jnp.einsum("bhqd,bhkd->bhqk", Q, K) * scale_inv
    scores = jnp.where(attn_mask, jnp.float32(-1e9), scores)
    attn_ref = jax.nn.softmax(scores, axis=-1)
    ctx_ref = jnp.einsum("bhqk,bhkd->bhqd", attn_ref, V)

    assert jnp.allclose(attn, attn_ref, atol=1e-5, rtol=1e-5), "attn mismatch vs reference"
    assert jnp.allclose(ctx, ctx_ref, atol=1e-5, rtol=1e-5), "context mismatch vs reference"

    print("KERNEL_OK")
</pallas_src>

<mosaic_0001>
module attributes {stable_mosaic.version = 11 : i64} {
  func.func @_sdpa_kernel(%arg0: i32, %arg1: i32, %arg2: memref<1x2x8x32xf32, #tpu.memory_space<vmem>>, %arg3: memref<1x2x8x32xf32, #tpu.memory_space<vmem>>, %arg4: memref<1x2x8x32xf32, #tpu.memory_space<vmem>>, %arg5: memref<1x2x8x8xi8, #tpu.memory_space<vmem>>, %arg6: memref<1x8x64xf32, #tpu.memory_space<vmem>>, %arg7: memref<1x2x8x8xf32, #tpu.memory_space<vmem>>) attributes {dimension_semantics = [#tpu.dimension_semantics<parallel>, #tpu.dimension_semantics<parallel>], iteration_bounds = array<i64: 2, 1>, scalar_prefetch = 0 : i64, scratch_operands = 0 : i64, tpu.core_type = #tpu.core_type<tc>, window_params = [{transform_indices = @transform_0, window_bounds = array<i64: 1, 2, 8, 32>}, {transform_indices = @transform_1, window_bounds = array<i64: 1, 2, 8, 32>}, {transform_indices = @transform_2, window_bounds = array<i64: 1, 2, 8, 32>}, {transform_indices = @transform_3, window_bounds = array<i64: 1, 2, 8, 8>}, {transform_indices = @transform_4, window_bounds = array<i64: 1, 8, 64>}, {transform_indices = @transform_5, window_bounds = array<i64: 1, 2, 8, 8>}]} {
    %c0 = arith.constant 0 : index
    %c0_0 = arith.constant 0 : index
    %c0_1 = arith.constant 0 : index
    %c0_2 = arith.constant 0 : index
    %0 = vector.load %arg2[%c0, %c0_0, %c0_1, %c0_2] : memref<1x2x8x32xf32, #tpu.memory_space<vmem>>, vector<1x2x8x32xf32>
    %1 = vector.shape_cast %0 : vector<1x2x8x32xf32> to vector<2x8x32xf32>
    %cst = arith.constant 0.176776692 : f32
    %2 = vector.broadcast %cst : f32 to vector<2x8x32xf32>
    %3 = arith.mulf %1, %2 : vector<2x8x32xf32>
    %c0_3 = arith.constant 0 : index
    %c0_4 = arith.constant 0 : index
    %c0_5 = arith.constant 0 : index
    %c0_6 = arith.constant 0 : index
    %4 = vector.load %arg3[%c0_3, %c0_4, %c0_5, %c0_6] : memref<1x2x8x32xf32, #tpu.memory_space<vmem>>, vector<1x2x8x32xf32>
    %5 = vector.shape_cast %4 : vector<1x2x8x32xf32> to vector<2x8x32xf32>
    "tpu.trace_start"() <{level = 10 : i32, message = "hqd,hkd->hqk"}> : () -> ()
    %cst_7 = arith.constant dense<0.000000e+00> : vector<2x8x8xf32>
    %6 = tpu.matmul %3, %5, %cst_7 {dimension_numbers = #tpu.dot_dimension_numbers<[2], [2], [1], [1], [0, 0, 0, 1, 1, 1], [0], [0]>} : vector<2x8x32xf32>, vector<2x8x32xf32>, vector<2x8x8xf32> -> vector<2x8x8xf32>
    "tpu.trace_stop"() : () -> ()
    %c0_8 = arith.constant 0 : index
    %c0_9 = arith.constant 0 : index
    %c0_10 = arith.constant 0 : index
    %c0_11 = arith.constant 0 : index
    %7 = vector.load %arg5[%c0_8, %c0_9, %c0_10, %c0_11] : memref<1x2x8x8xi8, #tpu.memory_space<vmem>>, vector<1x2x8x8xi8>
    %8 = vector.shape_cast %7 : vector<1x2x8x8xi8> to vector<2x8x8xi8>
    %c0_i8 = arith.constant 0 : i8
    %9 = vector.broadcast %c0_i8 : i8 to vector<2x8x8xi8>
    %10 = arith.cmpi ne, %8, %9 : vector<2x8x8xi8>
    %cst_12 = arith.constant -1.000000e+09 : f32
    %11 = vector.broadcast %cst_12 : f32 to vector<2x8x8xf32>
    %12 = arith.select %10, %11, %6 : vector<2x8x8xi1>, vector<2x8x8xf32>
    %cst_13 = arith.constant dense<0xFF800000> : vector<2x8xf32>
    %13 = vector.multi_reduction <maximumf>, %12, %cst_13 [2] : vector<2x8x8xf32> to vector<2x8xf32>
    %14 = vector.shape_cast %13 : vector<2x8xf32> to vector<2x8x1xf32>
    %15 = vector.broadcast %14 : vector<2x8x1xf32> to vector<2x8x8xf32>
    %16 = arith.subf %12, %15 : vector<2x8x8xf32>
    %17 = math.exp %16 : vector<2x8x8xf32>
    %cst_14 = arith.constant dense<0.000000e+00> : vector<2x8xf32>
    %18 = vector.multi_reduction <add>, %17, %cst_14 [2] : vector<2x8x8xf32> to vector<2x8xf32>
    %19 = vector.shape_cast %18 : vector<2x8xf32> to vector<2x8x1xf32>
    %20 = tpu.reciprocal %19 : vector<2x8x1xf32> -> vector<2x8x1xf32>
    %21 = vector.broadcast %20 : vector<2x8x1xf32> to vector<2x8x8xf32>
    %22 = arith.mulf %17, %21 : vector<2x8x8xf32>
    %c0_15 = arith.constant 0 : index
    %c0_16 = arith.constant 0 : index
    %c0_17 = arith.constant 0 : index
    %c0_18 = arith.constant 0 : index
    %23 = vector.load %arg7[%c0_15, %c0_16, %c0_17, %c0_18] : memref<1x2x8x8xf32, #tpu.memory_space<vmem>>, vector<1x2x8x8xf32>
    %24 = vector.shape_cast %23 : vector<1x2x8x8xf32> to vector<2x8x8xf32>
    %25 = vector.shape_cast %22 : vector<2x8x8xf32> to vector<1x2x8x8xf32>
    tpu.vector_store %arg7[%c0_15, %c0_16, %c0_17, %c0_18], %25 {strides = array<i32>} : memref<1x2x8x8xf32, #tpu.memory_space<vmem>>, vector<1x2x8x8xf32>,
    %26 = vector.extract_strided_slice %22 {offsets = [0, 0, 0], sizes = [1, 8, 8], strides = [1, 1, 1]} : vector<2x8x8xf32> to vector<1x8x8xf32>
    %27 = vector.shape_cast %26 : vector<1x8x8xf32> to vector<8x8xf32>
    %c0_19 = arith.constant 0 : index
    %c0_20 = arith.constant 0 : index
    %c0_21 = arith.constant 0 : index
    %c0_22 = arith.constant 0 : index
    %28 = vector.load %arg4[%c0_19, %c0_20, %c0_21, %c0_22] : memref<1x2x8x32xf32, #tpu.memory_space<vmem>>, vector<1x1x8x32xf32>
    %29 = vector.shape_cast %28 : vector<1x1x8x32xf32> to vector<8x32xf32>
    %cst_23 = arith.constant dense<0.000000e+00> : vector<8x32xf32>
    %30 = tpu.matmul %27, %29, %cst_23 {dimension_numbers = #tpu.dot_dimension_numbers<[1], [0], [0], [1], [0, 0, 1, 1], [], []>} : vector<8x8xf32>, vector<8x32xf32>, vector<8x32xf32> -> vector<8x32xf32>
    %c0_24 = arith.constant 0 : index
    %c0_25 = arith.constant 0 : index
    %c0_26 = arith.constant 0 : index
    %31 = vector.load %arg6[%c0_24, %c0_25, %c0_26] : memref<1x8x64xf32, #tpu.memory_space<vmem>>, vector<1x8x32xf32>
    %32 = vector.shape_cast %31 : vector<1x8x32xf32> to vector<8x32xf32>
    %33 = vector.shape_cast %30 : vector<8x32xf32> to vector<1x8x32xf32>
    tpu.vector_store %arg6[%c0_24, %c0_25, %c0_26], %33 {strides = array<i32>} : memref<1x8x64xf32, #tpu.memory_space<vmem>>, vector<1x8x32xf32>,
    %34 = vector.extract_strided_slice %22 {offsets = [1, 0, 0], sizes = [1, 8, 8], strides = [1, 1, 1]} : vector<2x8x8xf32> to vector<1x8x8xf32>
    %35 = vector.shape_cast %34 : vector<1x8x8xf32> to vector<8x8xf32>
    %c0_27 = arith.constant 0 : index
    %c1 = arith.constant 1 : index
    %c0_28 = arith.constant 0 : index
    %c0_29 = arith.constant 0 : index
    %36 = vector.load %arg4[%c0_27, %c1, %c0_28, %c0_29] : memref<1x2x8x32xf32, #tpu.memory_space<vmem>>, vector<1x1x8x32xf32>
    %37 = vector.shape_cast %36 : vector<1x1x8x32xf32> to vector<8x32xf32>
    %cst_30 = arith.constant dense<0.000000e+00> : vector<8x32xf32>
    %38 = tpu.matmul %35, %37, %cst_30 {dimension_numbers = #tpu.dot_dimension_numbers<[1], [0], [0], [1], [0, 0, 1, 1], [], []>} : vector<8x8xf32>, vector<8x32xf32>, vector<8x32xf32> -> vector<8x32xf32>
    %c0_31 = arith.constant 0 : index
    %c0_32 = arith.constant 0 : index
    %c32 = arith.constant 32 : index
    %39 = vector.load %arg6[%c0_31, %c0_32, %c32] : memref<1x8x64xf32, #tpu.memory_space<vmem>>, vector<1x8x32xf32>
    %40 = vector.shape_cast %39 : vector<1x8x32xf32> to vector<8x32xf32>
    %41 = vector.shape_cast %38 : vector<8x32xf32> to vector<1x8x32xf32>
    tpu.vector_store %arg6[%c0_31, %c0_32, %c32], %41 {strides = array<i32>} : memref<1x8x64xf32, #tpu.memory_space<vmem>>, vector<1x8x32xf32>,
    return
  }
  func.func @transform_0(%arg0: i32, %arg1: i32) -> (i32, i32, i32, i32) {
    %c0_i32 = arith.constant 0 : i32
    %c0_i32_0 = arith.constant 0 : i32
    %c0_i32_1 = arith.constant 0 : i32
    return %arg0, %c0_i32, %arg1, %c0_i32_0 : i32, i32, i32, i32
  }
  func.func @transform_1(%arg0: i32, %arg1: i32) -> (i32, i32, i32, i32) {
    %c0_i32 = arith.constant 0 : i32
    %c0_i32_0 = arith.constant 0 : i32
    %c0_i32_1 = arith.constant 0 : i32
    %c0_i32_2 = arith.constant 0 : i32
    return %arg0, %c0_i32, %c0_i32_0, %c0_i32_1 : i32, i32, i32, i32
  }
  func.func @transform_2(%arg0: i32, %arg1: i32) -> (i32, i32, i32, i32) {
    %c0_i32 = arith.constant 0 : i32
    %c0_i32_0 = arith.constant 0 : i32
    %c0_i32_1 = arith.constant 0 : i32
    %c0_i32_2 = arith.constant 0 : i32
    return %arg0, %c0_i32, %c0_i32_0, %c0_i32_1 : i32, i32, i32, i32
  }
  func.func @transform_3(%arg0: i32, %arg1: i32) -> (i32, i32, i32, i32) {
    %c0_i32 = arith.constant 0 : i32
    %c0_i32_0 = arith.constant 0 : i32
    %c0_i32_1 = arith.constant 0 : i32
    return %arg0, %c0_i32, %arg1, %c0_i32_0 : i32, i32, i32, i32
  }
  func.func @transform_4(%arg0: i32, %arg1: i32) -> (i32, i32, i32) {
    %c0_i32 = arith.constant 0 : i32
    %c0_i32_0 = arith.constant 0 : i32
    return %arg0, %arg1, %c0_i32 : i32, i32, i32
  }
  func.func @transform_5(%arg0: i32, %arg1: i32) -> (i32, i32, i32, i32) {
    %c0_i32 = arith.constant 0 : i32
    %c0_i32_0 = arith.constant 0 : i32
    %c0_i32_1 = arith.constant 0 : i32
    return %arg0, %c0_i32, %arg1, %c0_i32_0 : i32, i32, i32, i32
  }
}

</mosaic_0001>

<llo_original>
// kernel: tpu_custom_call.1
$region0: #{tpu_custom_call.1}
  #allocation0 [shape = 'u32[]', space=smem, size = 0x4, offset = 0x4, fixed_abs, tag = 'smem constant byte address 0x4 - core index']
  #allocation1 [shape = 'u32[144,128]{1,0:T(1,128)}', space=vmem, size = 0x12000, scoped, tag = 'internal scratch']
  %s0 = inlined_call_operand.hbm [shape: f32[2,2,8,32], index: 0, kind: input, shape index: {}]
  %s1 = inlined_call_operand.hbm [shape: f32[2,2,8,32], index: 1, kind: input, shape index: {}]
  %s2 = inlined_call_operand.hbm [shape: f32[2,2,8,32], index: 2, kind: input, shape index: {}]
  %s3 = inlined_call_operand.hbm [shape: s8[2,2,8,8], index: 3, kind: input, shape index: {}]
  %s4 = inlined_call_operand.hbm [shape: f32[2,8,64], index: 4, kind: output, shape index: {0}]
  %s5 = inlined_call_operand.hbm [shape: f32[2,2,8,8], index: 5, kind: output, shape index: {1}]
  %6 = xla_tuple %s4, %s5
  %s7 = sld [smem:[#allocation0]]
  $region73: #{tpu_custom_call.1} parent=0
    _
  %s9 = ssub.s32 1, %s7
  %s10 = scalar_select 0, %s9, %s7
  $region1: #{tpu_custom_call.1} parent=0
    #allocation2 [shape = 'u8[16384]{0}', space=vmem, size = 0x4000, scoped, tag = 'input window, operand 0']
    #allocation3 [shape = 's32[2]{0}', space=sflag, size = 0x8, scoped, tag = 'scoped memory for tpu_custom_call.1']
    #allocation4 [shape = 's32[2]{0}', space=sflag, size = 0x8, scoped, tag = 'scoped memory for tpu_custom_call.1']
    #allocation5 [shape = 'u8[16384]{0}', space=vmem, size = 0x4000, scoped, tag = 'input window, operand 1']
    #allocation6 [shape = 's32[2]{0}', space=sflag, size = 0x8, scoped, tag = 'scoped memory for tpu_custom_call.1']
    #allocation7 [shape = 'u8[16384]{0}', space=vmem, size = 0x4000, scoped, tag = 'input window, operand 2']
    #allocation8 [shape = 'u8[4096]{0}', space=vmem, size = 0x1000, scoped, tag = 'input window, operand 3']
    #allocation9 [shape = 's32[2]{0}', space=sflag, size = 0x8, scoped, tag = 'scoped memory for tpu_custom_call.1']
    #allocation10 [shape = 'u8[8192]{0}', space=vmem, size = 0x2000, scoped, tag = 'output window, operand 0']
    #allocation11 [shape = 'u8[16384]{0}', space=vmem, size = 0x4000, scoped, tag = 'output window, operand 1']
    #allocation12 [shape = 's32[2]{0}', space=sflag, size = 0x8, scoped, tag = 'scoped memory for tpu_custom_call.1']
    %11 = vsyncpa [#allocation3], 0
    %s12 = scalar_lea.sflag [#allocation3], 1
    %13 = vsyncpa %s12, 0
    %14 = vsyncpa [#allocation6], 0
    %s15 = scalar_lea.sflag [#allocation6], 1
    %16 = vsyncpa %s15, 0
    %17 = vsyncpa [#allocation9], 0
    %s18 = scalar_lea.sflag [#allocation9], 1
    %19 = vsyncpa %s18, 0
    %20 = vsyncpa [#allocation4], 0
    %s21 = scalar_lea.sflag [#allocation4], 1
    %22 = vsyncpa %s21, 0
    %23 = vsyncpa [#allocation12], 0
    %s24 = scalar_lea.sflag [#allocation12], 1
    %25 = vsyncpa %s24, 0
    loop: start=0, step=1, limit=4
    $region2: #{tpu_custom_call.1} parent=1 // loop_pre_header
      _
    $region3: #{tpu_custom_call.1} parent=1 // loop_header
      %s27 = sphi 0, %s31
      %p28 = scmp.ge.s32.totalorder %s27, 4
      %s34 = sphi 0, %s46
      %s35 = sphi 0, %s42
      %s36 = sphi 0, %s34
      %s37 = sphi 0, %s35
      %s38 = sphi 0, %s36
      %s39 = sphi 0, %s37
      %s51 = sphi 0, %s53
      %s54 = sphi 0, %s51
      %s55 = sphi 0, %s54
      %s71 = sphi 0, %s55
      %s77 = sphi 0, %s79
      %s80 = sphi 0, %s77
      %s81 = sphi 0, %s80
      %s97 = sphi 0, %s81
      %s103 = sphi 0, %s105
      %s106 = sphi 0, %s103
      %s107 = sphi 0, %s106
      %s123 = sphi 0, %s107
      %s131 = sphi 0, %s133
      %s134 = sphi 0, %s131
      %s135 = sphi 0, %s134
      %s151 = sphi 0, %s135
      %s159 = sphi 0, %s161
      %s162 = sphi 0, %s159
      %s163 = sphi 0, %s162
      %s179 = sphi 0, %s163
      %s187 = sphi 0, %s189
      %s190 = sphi 0, %s187
      %s191 = sphi 0, %s190
      %s207 = sphi 0, %s191
    $region4: #{tpu_custom_call.1} parent=1 // loop_header_branch
      %30 = sbr.rel (%p28) target = $region8
    $region5: #{tpu_custom_call.1} parent=1 // loop_body
      %s32 = ssub.s32 %s27, 1
      %s33 = ssub.s32 %s27, 2
      %s40 = sadd.s32 1, %s35
      %p41 = scmp.ge.s32.totalorder %s40, 1
      %s42 = scalar_select %p41, 0, %s40
      %s43 = sadd.s32 1, %s34
      %s44 = scalar_select %p41, %s43, %s34
      %p45 = scmp.ge.s32.totalorder %s44, 2
      %s46 = scalar_select %p45, 0, %s44
      %s47 = ssub.s32 %s34, %s46
      %s48 = ssub.s32 %s35, %s42
      %s49 = sor.u32 %s47, %s48
      %p50 = scmp.eq.s32.totalorder %s49, 0
      %s52 = sadd.s32 %s51, 1
      %s53 = scalar_select %p50, %s51, %s52
      %p56 = pneg %p50
      %p57 = scmp.eq.s32.totalorder %s27, 1
      %p58 = por %p56, %p57
      %p59 = scmp.ne.s32.totalorder %s51, %s54
      %p60 = scmp.eq.s32.totalorder %s27, 0
      %p61 = por %p59, %p60
      %p62 = scmp.ne.s32.totalorder %s51, %s54
      %p63 = scmp.eq.s32.totalorder %s32, 1
      %p64 = por %p62, %p63
      %p65 = scmp.ne.s32.totalorder %s54, %s55
      %p66 = scmp.eq.s32.totalorder %s32, 0
      %p67 = por %p65, %p66
      %p68 = scmp.ne.s32.totalorder %s54, %s55
      %p69 = scmp.eq.s32.totalorder %s33, 1
      %p70 = por %p68, %p69
      %p72 = scmp.ne.s32.totalorder %s55, %s71
      %p73 = scmp.eq.s32.totalorder %s33, 0
      %p74 = por %p72, %p73
      %s75 = ssub.s32 %s34, %s46
      %p76 = scmp.eq.s32.totalorder %s75, 0
      %s78 = sadd.s32 %s77, 1
      %s79 = scalar_select %p76, %s77, %s78
      %p82 = pneg %p76
      %p83 = scmp.eq.s32.totalorder %s27, 1
      %p84 = por %p82, %p83
      %p85 = scmp.ne.s32.totalorder %s77, %s80
      %p86 = scmp.eq.s32.totalorder %s27, 0
      %p87 = por %p85, %p86
      %p88 = scmp.ne.s32.totalorder %s77, %s80
      %p89 = scmp.eq.s32.totalorder %s32, 1
      %p90 = por %p88, %p89
      %p91 = scmp.ne.s32.totalorder %s80, %s81
      %p92 = scmp.eq.s32.totalorder %s32, 0
      %p93 = por %p91, %p92
      %p94 = scmp.ne.s32.totalorder %s80, %s81
      %p95 = scmp.eq.s32.totalorder %s33, 1
      %p96 = por %p94, %p95
      %p98 = scmp.ne.s32.totalorder %s81, %s97
      %p99 = scmp.eq.s32.totalorder %s33, 0
      %p100 = por %p98, %p99
      %s101 = ssub.s32 %s34, %s46
      %p102 = scmp.eq.s32.totalorder %s101, 0
      %s104 = sadd.s32 %s103, 1
      %s105 = scalar_select %p102, %s103, %s104
      %p108 = pneg %p102
      %p109 = scmp.eq.s32.totalorder %s27, 1
      %p110 = por %p108, %p109
      %p111 = scmp.ne.s32.totalorder %s103, %s106
      %p112 = scmp.eq.s32.totalorder %s27, 0
      %p113 = por %p111, %p112
      %p114 = scmp.ne.s32.totalorder %s103, %s106
      %p115 = scmp.eq.s32.totalorder %s32, 1
      %p116 = por %p114, %p115
      %p117 = scmp.ne.s32.totalorder %s106, %s107
      %p118 = scmp.eq.s32.totalorder %s32, 0
      %p119 = por %p117, %p118
      %p120 = scmp.ne.s32.totalorder %s106, %s107
      %p121 = scmp.eq.s32.totalorder %s33, 1
      %p122 = por %p120, %p121
      %p124 = scmp.ne.s32.totalorder %s107, %s123
      %p125 = scmp.eq.s32.totalorder %s33, 0
      %p126 = por %p124, %p125
      %s127 = ssub.s32 %s34, %s46
      %s128 = ssub.s32 %s35, %s42
      %s129 = sor.u32 %s127, %s128
      %p130 = scmp.eq.s32.totalorder %s129, 0
      %s132 = sadd.s32 %s131, 1
      %s133 = scalar_select %p130, %s131, %s132
      %p136 = pneg %p130
      %p137 = scmp.eq.s32.totalorder %s27, 1
      %p138 = por %p136, %p137
      %p139 = scmp.ne.s32.totalorder %s131, %s134
      %p140 = scmp.eq.s32.totalorder %s27, 0
      %p141 = por %p139, %p140
      %p142 = scmp.ne.s32.totalorder %s131, %s134
      %p143 = scmp.eq.s32.totalorder %s32, 1
      %p144 = por %p142, %p143
      %p145 = scmp.ne.s32.totalorder %s134, %s135
      %p146 = scmp.eq.s32.totalorder %s32, 0
      %p147 = por %p145, %p146
      %p148 = scmp.ne.s32.totalorder %s134, %s135
      %p149 = scmp.eq.s32.totalorder %s33, 1
      %p150 = por %p148, %p149
      %p152 = scmp.ne.s32.totalorder %s135, %s151
      %p153 = scmp.eq.s32.totalorder %s33, 0
      %p154 = por %p152, %p153
      %s155 = ssub.s32 %s34, %s46
      %s156 = ssub.s32 %s35, %s42
      %s157 = sor.u32 %s155, %s156
      %p158 = scmp.eq.s32.totalorder %s157, 0
      %s160 = sadd.s32 %s159, 1
      %s161 = scalar_select %p158, %s159, %s160
      %p164 = pneg %p158
      %p165 = scmp.eq.s32.totalorder %s27, 1
      %p166 = por %p164, %p165
      %p167 = scmp.ne.s32.totalorder %s159, %s162
      %p168 = scmp.eq.s32.totalorder %s27, 0
      %p169 = por %p167, %p168
      %p170 = scmp.ne.s32.totalorder %s159, %s162
      %p171 = scmp.eq.s32.totalorder %s32, 1
      %p172 = por %p170, %p171
      %p173 = scmp.ne.s32.totalorder %s162, %s163
      %p174 = scmp.eq.s32.totalorder %s32, 0
      %p175 = por %p173, %p174
      %p176 = scmp.ne.s32.totalorder %s162, %s163
      %p177 = scmp.eq.s32.totalorder %s33, 1
      %p178 = por %p176, %p177
      %p180 = scmp.ne.s32.totalorder %s163, %s179
      %p181 = scmp.eq.s32.totalorder %s33, 0
      %p182 = por %p180, %p181
      %s183 = ssub.s32 %s34, %s46
      %s184 = ssub.s32 %s35, %s42
      %s185 = sor.u32 %s183, %s184
      %p186 = scmp.eq.s32.totalorder %s185, 0
      %s188 = sadd.s32 %s187, 1
      %s189 = scalar_select %p186, %s187, %s188
      %p192 = pneg %p186
      %p193 = scmp.eq.s32.totalorder %s27, 1
      %p194 = por %p192, %p193
      %p195 = scmp.ne.s32.totalorder %s187, %s190
      %p196 = scmp.eq.s32.totalorder %s27, 0
      %p197 = por %p195, %p196
      %p198 = scmp.ne.s32.totalorder %s187, %s190
      %p199 = scmp.eq.s32.totalorder %s32, 1
      %p200 = por %p198, %p199
      %p201 = scmp.ne.s32.totalorder %s190, %s191
      %p202 = scmp.eq.s32.totalorder %s32, 0
      %p203 = por %p201, %p202
      %p204 = scmp.ne.s32.totalorder %s190, %s191
      %p205 = scmp.eq.s32.totalorder %s33, 1
      %p206 = por %p204, %p205
      %p208 = scmp.ne.s32.totalorder %s191, %s207
      %p209 = scmp.eq.s32.totalorder %s33, 0
      %p210 = por %p208, %p209
      %p211 = scmp.le.s32.totalorder 1, %s27
      %p212 = scmp.lt.s32.totalorder %s27, 3
      %p213 = pnand %p211, %p212
      %p214 = pneg %p213
      // Predicated region
      $region9: #{tpu_custom_call.1} parent=5 // pred_check
        _
      $region10: #{tpu_custom_call.1} parent=5 // pred_check_branch
        %216 = sbr.rel (%p213) target = $region12
      $region11: #{tpu_custom_call.1} parent=5 // pred_region
        %s217 = ssub.s32 %s27, 1
      $region12: #{tpu_custom_call.1} parent=5 // pred_fallthru
        _
      %p218 = scmp.lt.s32.totalorder %s27, 2
      // Predicated region
      $region13: #{tpu_custom_call.1} parent=5 // pred_check
        %p219 = pneg %p218
      $region14: #{tpu_custom_call.1} parent=5 // pred_check_branch
        %221 = sbr.rel (%p219) target = $region16
      $region15: #{tpu_custom_call.1} parent=5 // pred_region
        // Predicated region
        $region17: #{tpu_custom_call.1} parent=15 // pred_check
          %p222 = pneg %p61
        $region18: #{tpu_custom_call.1} parent=15 // pred_check_branch
          %224 = sbr.rel (%p222) target = $region20
        $region19: #{tpu_custom_call.1} parent=15 // pred_region
          %s225 = sand.u32 %s51, 1
          %s226 = scalar_lea.sflag [#allocation3], %s225
          %s227 = sand.u32 %s51, 1
          %s228 = smul.addr %s227, 16
          %s229 = scalar_lea.vmem [#allocation2], %s228
          %s231 = ssub.s32 256, 256
          %232 = vsyncadd %s226, %s231
          %s233 = smul.addr %s34, 2
          %s234 = sadd.s32 %s35, %s233
          %s235 = smul.addr %s234, 128
          %s236 = scalar_lea.hbm %s0, %s235
          %s237 = sshll.u32 %s229, 4
          %s238 = int_to_ptr.vmem [resolvable:$true] %s237
          %243 = dma.hbm_to_vmem [thread:$0]  %s236, 256, %s238, %s226, 128, 128, 8
        $region20: #{tpu_custom_call.1} parent=15 // pred_fallthru
          _
        // Predicated region
        $region21: #{tpu_custom_call.1} parent=15 // pred_check
          %p244 = pneg %p87
        $region22: #{tpu_custom_call.1} parent=15 // pred_check_branch
          %246 = sbr.rel (%p244) target = $region24
        $region23: #{tpu_custom_call.1} parent=15 // pred_region
          %s247 = sand.u32 %s27, 1
          %s248 = scalar_lea.sflag [#allocation6], %s247
          %s249 = sand.u32 %s77, 1
          %s250 = smul.addr %s249, 16
          %s251 = scalar_lea.vmem [#allocation5], %s250
          %s253 = ssub.s32 256, 256
          %254 = vsyncadd %s248, %s253
          %s255 = smul.addr %s34, 2
          %s256 = smul.addr %s255, 128
          %s257 = scalar_lea.hbm %s1, %s256
          %s258 = sshll.u32 %s251, 4
          %s259 = int_to_ptr.vmem [resolvable:$true] %s258
          %264 = dma.hbm_to_vmem [thread:$0]  %s257, 256, %s259, %s248, 128, 128, 8
        $region24: #{tpu_custom_call.1} parent=15 // pred_fallthru
          _
        // Predicated region
        $region25: #{tpu_custom_call.1} parent=15 // pred_check
          %p265 = pneg %p113
        $region26: #{tpu_custom_call.1} parent=15 // pred_check_branch
          %267 = sbr.rel (%p265) target = $region28
        $region27: #{tpu_custom_call.1} parent=15 // pred_region
          %s268 = sand.u32 %s27, 1
          %s269 = scalar_lea.sflag [#allocation6], %s268
          %s270 = sand.u32 %s103, 1
          %s271 = smul.addr %s270, 16
          %s272 = scalar_lea.vmem [#allocation7], %s271
          %s274 = ssub.s32 256, 256
          %275 = vsyncadd %s269, %s274
          %s276 = smul.addr %s34, 2
          %s277 = smul.addr %s276, 128
          %s278 = scalar_lea.hbm %s2, %s277
          %s279 = sshll.u32 %s272, 4
          %s280 = int_to_ptr.vmem [resolvable:$true] %s279
          %285 = dma.hbm_to_vmem [thread:$0]  %s278, 256, %s280, %s269, 128, 128, 8
        $region28: #{tpu_custom_call.1} parent=15 // pred_fallthru
          _
        // Predicated region
        $region29: #{tpu_custom_call.1} parent=15 // pred_check
          %p286 = pneg %p141
        $region30: #{tpu_custom_call.1} parent=15 // pred_check_branch
          %288 = sbr.rel (%p286) target = $region32
        $region31: #{tpu_custom_call.1} parent=15 // pred_region
          %s289 = sand.u32 %s131, 1
          %s290 = scalar_lea.sflag [#allocation9], %s289
          %s291 = sand.u32 %s131, 1
          %s292 = smul.addr %s291, 4
          %s293 = scalar_lea.vmem [#allocation8], %s292
          %s295 = ssub.s32 64, 64
          %296 = vsyncadd %s290, %s295
          %s297 = smul.addr %s34, 2
          %s298 = sadd.s32 %s35, %s297
          %s299 = smul.addr %s298, 32
          %s300 = scalar_lea.hbm %s3, %s299
          %s301 = sshll.u32 %s293, 4
          %s302 = int_to_ptr.vmem [resolvable:$true] %s301
          %307 = dma.hbm_to_vmem [thread:$0]  %s300, 64, %s302, %s290, 32, 32, 2
        $region32: #{tpu_custom_call.1} parent=15 // pred_fallthru
          _
      $region16: #{tpu_custom_call.1} parent=5 // pred_fallthru
        _
      %p308 = scmp.le.s32.totalorder 1, %s27
      %p309 = scmp.lt.s32.totalorder %s27, 3
      %p310 = pnand %p308, %p309
      %p311 = pneg %p310
      // Predicated region
      $region33: #{tpu_custom_call.1} parent=5 // pred_check
        _
      $region34: #{tpu_custom_call.1} parent=5 // pred_check_branch
        %313 = sbr.rel (%p310) target = $region36
      $region35: #{tpu_custom_call.1} parent=5 // pred_region
        %s314 = ssub.s32 %s27, 1
        %s315 = sand.u32 %s54, 1
        %s316 = scalar_lea.sflag [#allocation3], %s315
        %s317 = sand.u32 %s54, 1
        %s318 = smul.addr %s317, 16
        %s319 = scalar_lea.vmem [#allocation2], %s318
        // Predicated region
        $region37: #{tpu_custom_call.1} parent=35 // pred_check
          %p320 = pneg %p67
        $region38: #{tpu_custom_call.1} parent=35 // pred_check_branch
          %322 = sbr.rel (%p320) target = $region40
        $region39: #{tpu_custom_call.1} parent=35 // pred_region
          %323 = dma.done %s316, 256
        $region40: #{tpu_custom_call.1} parent=35 // pred_fallthru
          _
        %s324 = sand.u32 %s32, 1
        %s325 = scalar_lea.sflag [#allocation6], %s324
        %s326 = sand.u32 %s80, 1
        %s327 = smul.addr %s326, 16
        %s328 = scalar_lea.vmem [#allocation5], %s327
        // Predicated region
        $region41: #{tpu_custom_call.1} parent=35 // pred_check
          %p329 = pneg %p93
        $region42: #{tpu_custom_call.1} parent=35 // pred_check_branch
          %331 = sbr.rel (%p329) target = $region44
        $region43: #{tpu_custom_call.1} parent=35 // pred_region
          %332 = dma.done %s325, 256
        $region44: #{tpu_custom_call.1} parent=35 // pred_fallthru
          _
        %s333 = sand.u32 %s32, 1
        %s334 = scalar_lea.sflag [#allocation6], %s333
        %s335 = sand.u32 %s106, 1
        %s336 = smul.addr %s335, 16
        %s337 = scalar_lea.vmem [#allocation7], %s336
        // Predicated region
        $region45: #{tpu_custom_call.1} parent=35 // pred_check
          %p338 = pneg %p119
        $region46: #{tpu_custom_call.1} parent=35 // pred_check_branch
          %340 = sbr.rel (%p338) target = $region48
        $region47: #{tpu_custom_call.1} parent=35 // pred_region
          %341 = dma.done %s334, 256
        $region48: #{tpu_custom_call.1} parent=35 // pred_fallthru
          _
        %s342 = sand.u32 %s134, 1
        %s343 = scalar_lea.sflag [#allocation9], %s342
        %s344 = sand.u32 %s134, 1
        %s345 = smul.addr %s344, 4
        %s346 = scalar_lea.vmem [#allocation8], %s345
        // Predicated region
        $region49: #{tpu_custom_call.1} parent=35 // pred_check
          %p347 = pneg %p147
        $region50: #{tpu_custom_call.1} parent=35 // pred_check_branch
          %349 = sbr.rel (%p347) target = $region52
        $region51: #{tpu_custom_call.1} parent=35 // pred_region
          %350 = dma.done %s343, 64
        $region52: #{tpu_custom_call.1} parent=35 // pred_fallthru
          _
        %s351 = sand.u32 %s54, 1
        %s352 = scalar_lea.sflag [#allocation3], %s351
        %s353 = sand.u32 %s54, 1
        %s354 = smul.addr %s353, 16
        %s355 = scalar_lea.vmem [#allocation2], %s354
        %p356 = pneg %p67
        %p357 = pneg %p64
        %s358 = sand.u32 %s32, 1
        %s359 = scalar_lea.sflag [#allocation6], %s358
        %s360 = sand.u32 %s80, 1
        %s361 = smul.addr %s360, 16
        %s362 = scalar_lea.vmem [#allocation5], %s361
        %p363 = pneg %p93
        %p364 = pneg %p90
        %s365 = sand.u32 %s32, 1
        %s366 = scalar_lea.sflag [#allocation6], %s365
        %s367 = sand.u32 %s106, 1
        %s368 = smul.addr %s367, 16
        %s369 = scalar_lea.vmem [#allocation7], %s368
        %p370 = pneg %p119
        %p371 = pneg %p116
        %s372 = sand.u32 %s134, 1
        %s373 = scalar_lea.sflag [#allocation9], %s372
        %s374 = sand.u32 %s134, 1
        %s375 = smul.addr %s374, 4
        %s376 = scalar_lea.vmem [#allocation8], %s375
        %p377 = pneg %p147
        %p378 = pneg %p144
        %p379 = pneg %p175
        %p380 = pneg %p172
        %s381 = sand.u32 %s162, 1
        %s382 = scalar_lea.sflag [#allocation4], %s381
        %s383 = sand.u32 %s162, 1
        %s384 = smul.addr %s383, 8
        %s385 = scalar_lea.vmem [#allocation10], %s384
        %p386 = pneg %p203
        %p387 = pneg %p200
        %s388 = sand.u32 %s190, 1
        %s389 = scalar_lea.sflag [#allocation12], %s388
        %s390 = sand.u32 %s190, 1
        %s391 = smul.addr %s390, 16
        %s392 = scalar_lea.vmem [#allocation11], %s391
        %v395 = vld [vmem:[%s319] sm:$0xff]
        %v396 = vld [vmem:[%s319 + $0x8] sm:$0xff]
        %v397 = vmul.f32 %v395, 0.17677669
        %v398 = vmul.f32 %v396, 0.17677669
        %v399 = vld [vmem:[%s328] sm:$0xff]
        %v400 = vld [vmem:[%s328 + $0x8] sm:$0xff]
        %vm401 = vcmask 261120
        %v403 = vsel %vm401, %v397, 0
        %v406 = vsel %vm401, %v399, 0
        %408 = vmatprep.subr.mxu0 0.0
        %409 = vmatpush1.xpose.msra.mxu0 0.0
        %410 = vmatprep.subr.mxu0 0.0
        %411 = vmatpush1.xpose.msra.mxu0 0.0
        %412 = vmatprep.subr.mxu0 0.0
        %413 = vmatpush1.xpose.msra.mxu0 0.0
        %414 = vmatprep.subr.mxu0 0.0
        %415 = vmatpush1.xpose.msra.mxu0 0.0
        %416 = vmatprep.subr.mxu0 0.0
        %417 = vmatpush1.xpose.msra.mxu0 0.0
        %418 = vmatprep.subr.mxu0 0.0
        %419 = vmatpush1.xpose.msra.mxu0 0.0
        %420 = vmatprep.subr.mxu0 0.0
        %421 = vmatpush1.xpose.msra.mxu0 0.0
        %422 = vmatprep.subr.mxu0 0.0
        %423 = vmatpush1.xpose.msra.mxu0 0.0
        %424 = vmatprep.subr.mxu0 0.0
        %425 = vmatpush1.xpose.msra.mxu0 0.0
        %426 = vmatprep.subr.mxu0 0.0
        %427 = vmatpush1.xpose.msra.mxu0 0.0
        %428 = vmatprep.subr.mxu0 0.0
        %429 = vmatpush1.xpose.msra.mxu0 0.0
        %430 = vmatprep.subr.mxu0 0.0
        %431 = vmatpush1.xpose.msra.mxu0 0.0
        %432 = vmatprep.subr.mxu0 0.0
        %433 = vmatpush1.xpose.msra.mxu0 0.0
        %434 = vmatprep.subr.mxu0 0.0
        %435 = vmatpush1.xpose.msra.mxu0 0.0
        %436 = vmatprep.subr.mxu0 0.0
        %437 = vmatpush1.xpose.msra.mxu0 0.0
        %438 = vmatprep.subr.mxu0 0.0
        %439 = vmatpush1.xpose.msra.mxu0 %v406
        %440 = vmatprep.subr.mxu0 0.0
        %441 = vmatpush2.xpose.msra.mxu0 0.0
        %442 = vmatprep.subr.mxu0 0.0
        %443 = vmatpush2.xpose.msra.mxu0 0.0
        %444 = vmatprep.subr.mxu0 0.0
        %445 = vmatpush2.xpose.msra.mxu0 0.0
        %446 = vmatprep.subr.mxu0 0.0
        %447 = vmatpush2.xpose.msra.mxu0 0.0
        %448 = vmatprep.subr.mxu0 0.0
        %449 = vmatpush2.xpose.msra.mxu0 0.0
        %450 = vmatprep.subr.mxu0 0.0
        %451 = vmatpush2.xpose.msra.mxu0 0.0
        %452 = vmatprep.subr.mxu0 0.0
        %453 = vmatpush2.xpose.msra.mxu0 0.0
        %454 = vmatprep.subr.mxu0 0.0
        %455 = vmatpush2.xpose.msra.mxu0 0.0
        %456 = vmatprep.subr.mxu0 0.0
        %457 = vmatpush2.xpose.msra.mxu0 0.0
        %458 = vmatprep.subr.mxu0 0.0
        %459 = vmatpush2.xpose.msra.mxu0 0.0
        %460 = vmatprep.subr.mxu0 0.0
        %461 = vmatpush2.xpose.msra.mxu0 0.0
        %462 = vmatprep.subr.mxu0 0.0
        %463 = vmatpush2.xpose.msra.mxu0 0.0
        %464 = vmatprep.subr.mxu0 0.0
        %465 = vmatpush2.xpose.msra.mxu0 0.0
        %466 = vmatprep.subr.mxu0 0.0
        %467 = vmatpush2.xpose.msra.mxu0 0.0
        %468 = vmatprep.subr.mxu0 0.0
        %469 = vmatpush2.xpose.msra.mxu0 0.0
        %470 = vmatprep.subr.mxu0 0.0
        %471 = vmatpush2.xpose.msra.mxu0 0.0
        %472 = vmatprep.mubr.f32.mxu0 0.0
        %473 = vmatmul.mubr.f32.gmra.mxu0 %v403
        %v474 = vpop.f32.mrf.mxu0
        %v475 = vadd.f32 0.0, %v474
        %v476 = vpop.f32.mrf.mxu0
        %477 = vdwg.mxu0
        %v479 = vsel %vm401, %v398, 0
        %v482 = vsel %vm401, %v400, 0
        %484 = vmatprep.subr.mxu0 0.0
        %485 = vmatpush1.xpose.msra.mxu0 0.0
        %486 = vmatprep.subr.mxu0 0.0
        %487 = vmatpush1.xpose.msra.mxu0 0.0
        %488 = vmatprep.subr.mxu0 0.0
        %489 = vmatpush1.xpose.msra.mxu0 0.0
        %490 = vmatprep.subr.mxu0 0.0
        %491 = vmatpush1.xpose.msra.mxu0 0.0
        %492 = vmatprep.subr.mxu0 0.0
        %493 = vmatpush1.xpose.msra.mxu0 0.0
        %494 = vmatprep.subr.mxu0 0.0
        %495 = vmatpush1.xpose.msra.mxu0 0.0
        %496 = vmatprep.subr.mxu0 0.0
        %497 = vmatpush1.xpose.msra.mxu0 0.0
        %498 = vmatprep.subr.mxu0 0.0
        %499 = vmatpush1.xpose.msra.mxu0 0.0
        %500 = vmatprep.subr.mxu0 0.0
        %501 = vmatpush1.xpose.msra.mxu0 0.0
        %502 = vmatprep.subr.mxu0 0.0
        %503 = vmatpush1.xpose.msra.mxu0 0.0
        %504 = vmatprep.subr.mxu0 0.0
        %505 = vmatpush1.xpose.msra.mxu0 0.0
        %506 = vmatprep.subr.mxu0 0.0
        %507 = vmatpush1.xpose.msra.mxu0 0.0
        %508 = vmatprep.subr.mxu0 0.0
        %509 = vmatpush1.xpose.msra.mxu0 0.0
        %510 = vmatprep.subr.mxu0 0.0
        %511 = vmatpush1.xpose.msra.mxu0 0.0
        %512 = vmatprep.subr.mxu0 0.0
        %513 = vmatpush1.xpose.msra.mxu0 0.0
        %514 = vmatprep.subr.mxu0 0.0
        %515 = vmatpush1.xpose.msra.mxu0 %v482
        %516 = vmatprep.subr.mxu0 0.0
        %517 = vmatpush2.xpose.msra.mxu0 0.0
        %518 = vmatprep.subr.mxu0 0.0
        %519 = vmatpush2.xpose.msra.mxu0 0.0
        %520 = vmatprep.subr.mxu0 0.0
        %521 = vmatpush2.xpose.msra.mxu0 0.0
        %522 = vmatprep.subr.mxu0 0.0
        %523 = vmatpush2.xpose.msra.mxu0 0.0
        %524 = vmatprep.subr.mxu0 0.0
        %525 = vmatpush2.xpose.msra.mxu0 0.0
        %526 = vmatprep.subr.mxu0 0.0
        %527 = vmatpush2.xpose.msra.mxu0 0.0
        %528 = vmatprep.subr.mxu0 0.0
        %529 = vmatpush2.xpose.msra.mxu0 0.0
        %530 = vmatprep.subr.mxu0 0.0
        %531 = vmatpush2.xpose.msra.mxu0 0.0
        %532 = vmatprep.subr.mxu0 0.0
        %533 = vmatpush2.xpose.msra.mxu0 0.0
        %534 = vmatprep.subr.mxu0 0.0
        %535 = vmatpush2.xpose.msra.mxu0 0.0
        %536 = vmatprep.subr.mxu0 0.0
        %537 = vmatpush2.xpose.msra.mxu0 0.0
        %538 = vmatprep.subr.mxu0 0.0
        %539 = vmatpush2.xpose.msra.mxu0 0.0
        %540 = vmatprep.subr.mxu0 0.0
        %541 = vmatpush2.xpose.msra.mxu0 0.0
        %542 = vmatprep.subr.mxu0 0.0
        %543 = vmatpush2.xpose.msra.mxu0 0.0
        %544 = vmatprep.subr.mxu0 0.0
        %545 = vmatpush2.xpose.msra.mxu0 0.0
        %546 = vmatprep.subr.mxu0 0.0
        %547 = vmatpush2.xpose.msra.mxu0 0.0
        %548 = vmatprep.mubr.f32.mxu0 0.0
        %549 = vmatmul.mubr.f32.gmra.mxu0 %v479
        %v550 = vpop.f32.mrf.mxu0
        %v551 = vadd.f32 0.0, %v550
        %v552 = vpop.f32.mrf.mxu0
        %553 = vdwg.mxu0
        %v554 = vld [vmem:[%s346] sm:$0x3]
        %v555 = vld [vmem:[%s346 + $0x2] sm:$0x3]
        %vm556 = vnez %v554
        %vm557 = vnez %v555
        %v558 = vsel %vm556, 16843009, 0
        %v559 = vsel %vm557, 16843009, 0
        %v560 = vunpack.c.0.s8 %v558
        %v561 = vunpack.c.0.s8 %v559
        %vm562 = vcmp.ne.s32.totalorder %v560, 0
        %vm563 = vcmp.ne.s32.totalorder %v561, 0
        %v564 = vsel %vm562, -1e+09, %v475
        %v565 = vsel %vm563, -1e+09, %v551
        %vm566 = vcmask 64512
        %v567 = vsel %vm566, %v564, -inf
        %568 = vmax.xlane.f32.xlu0 %v567
        %v569 = vpop.xlane.xlu0 %568
        %v570 = vsel %vm566, %v565, -inf
        %571 = vmax.xlane.f32.xlu0 %v570
        %v572 = vpop.xlane.xlu0 %571
        %v573 = vsub.f32 %v564, %v569
        %v574 = vsub.f32 %v565, %v572
        %v575 = vmul.f32 %v573, 1.442695
        %v576 = vpow.pop %v575
        %v577 = vmul.f32 %v574, 1.442695
        %v578 = vpow.pop %v577
        %v579 = vsel %vm566, %v576, 0.0
        %580 = vadd.xlane.f32.xlu0 %v579
        %v581 = vpop.xlane.xlu0 %580
        %v582 = vsel %vm566, %v578, 0.0
        %583 = vadd.xlane.f32.xlu0 %v582
        %v584 = vpop.xlane.xlu0 %583
        %v585 = vrcp.pop %v581
        %v586 = vrcp.pop %v584
        %v587 = vmul.f32 %v576, %v585
        %v588 = vmul.f32 %v578, %v586
        %589 = vst.msk [vmem:[%s392] sm:$0xff] %vm566, %v587
        %590 = vst.msk [vmem:[%s392 + $0x8] sm:$0xff] %vm566, %v588
        %v591 = vld [vmem:[%s337] sm:$0xff]
        %v593 = vsel %vm566, %v587, 0
        %595 = vmatprep.subr.mxu0 0.0
        %596 = vmatpush1.msra.mxu0 0.0
        %597 = vmatprep.subr.mxu0 0.0
        %598 = vmatpush1.msra.mxu0 0.0
        %599 = vmatprep.subr.mxu0 0.0
        %600 = vmatpush1.msra.mxu0 0.0
        %601 = vmatprep.subr.mxu0 0.0
        %602 = vmatpush1.msra.mxu0 0.0
        %603 = vmatprep.subr.mxu0 0.0
        %604 = vmatpush1.msra.mxu0 0.0
        %605 = vmatprep.subr.mxu0 0.0
        %606 = vmatpush1.msra.mxu0 0.0
        %607 = vmatprep.subr.mxu0 0.0
        %608 = vmatpush1.msra.mxu0 0.0
        %609 = vmatprep.subr.mxu0 0.0
        %610 = vmatpush1.msra.mxu0 0.0
        %611 = vmatprep.subr.mxu0 0.0
        %612 = vmatpush1.msra.mxu0 0.0
        %613 = vmatprep.subr.mxu0 0.0
        %614 = vmatpush1.msra.mxu0 0.0
        %615 = vmatprep.subr.mxu0 0.0
        %616 = vmatpush1.msra.mxu0 0.0
        %617 = vmatprep.subr.mxu0 0.0
        %618 = vmatpush1.msra.mxu0 0.0
        %619 = vmatprep.subr.mxu0 0.0
        %620 = vmatpush1.msra.mxu0 0.0
        %621 = vmatprep.subr.mxu0 0.0
        %622 = vmatpush1.msra.mxu0 0.0
        %623 = vmatprep.subr.mxu0 0.0
        %624 = vmatpush1.msra.mxu0 0.0
        %625 = vmatprep.subr.mxu0 0.0
        %626 = vmatpush1.msra.mxu0 %v591
        %627 = vmatprep.subr.mxu0 0.0
        %628 = vmatpush2.msra.mxu0 0.0
        %629 = vmatprep.subr.mxu0 0.0
        %630 = vmatpush2.msra.mxu0 0.0
        %631 = vmatprep.subr.mxu0 0.0
        %632 = vmatpush2.msra.mxu0 0.0
        %633 = vmatprep.subr.mxu0 0.0
        %634 = vmatpush2.msra.mxu0 0.0
        %635 = vmatprep.subr.mxu0 0.0
        %636 = vmatpush2.msra.mxu0 0.0
        %637 = vmatprep.subr.mxu0 0.0
        %638 = vmatpush2.msra.mxu0 0.0
        %639 = vmatprep.subr.mxu0 0.0
        %640 = vmatpush2.msra.mxu0 0.0
        %641 = vmatprep.subr.mxu0 0.0
        %642 = vmatpush2.msra.mxu0 0.0
        %643 = vmatprep.subr.mxu0 0.0
        %644 = vmatpush2.msra.mxu0 0.0
        %645 = vmatprep.subr.mxu0 0.0
        %646 = vmatpush2.msra.mxu0 0.0
        %647 = vmatprep.subr.mxu0 0.0
        %648 = vmatpush2.msra.mxu0 0.0
        %649 = vmatprep.subr.mxu0 0.0
        %650 = vmatpush2.msra.mxu0 0.0
        %651 = vmatprep.subr.mxu0 0.0
        %652 = vmatpush2.msra.mxu0 0.0
        %653 = vmatprep.subr.mxu0 0.0
        %654 = vmatpush2.msra.mxu0 0.0
        %655 = vmatprep.subr.mxu0 0.0
        %656 = vmatpush2.msra.mxu0 0.0
        %657 = vmatprep.subr.mxu0 0.0
        %658 = vmatpush2.msra.mxu0 0.0
        %659 = vmatprep.mubr.f32.mxu0 0.0
        %660 = vmatmul.mubr.f32.gmra.mxu0 %v593
        %v661 = vpop.f32.mrf.mxu0
        %v662 = vadd.f32 0.0, %v661
        %v663 = vpop.f32.mrf.mxu0
        %664 = vdwg.mxu0
        %665 = vst.msk [vmem:[%s385] sm:$0xff] %vm401, %v662
        %s666 = scalar_lea.vmem %s337, 8 [#allocation7]
        %v667 = vld [vmem:[%s666] sm:$0xff]
        %v669 = vsel %vm566, %v588, 0
        %671 = vmatprep.subr.mxu0 0.0
        %672 = vmatpush1.msra.mxu0 0.0
        %673 = vmatprep.subr.mxu0 0.0
        %674 = vmatpush1.msra.mxu0 0.0
        %675 = vmatprep.subr.mxu0 0.0
        %676 = vmatpush1.msra.mxu0 0.0
        %677 = vmatprep.subr.mxu0 0.0
        %678 = vmatpush1.msra.mxu0 0.0
        %679 = vmatprep.subr.mxu0 0.0
        %680 = vmatpush1.msra.mxu0 0.0
        %681 = vmatprep.subr.mxu0 0.0
        %682 = vmatpush1.msra.mxu0 0.0
        %683 = vmatprep.subr.mxu0 0.0
        %684 = vmatpush1.msra.mxu0 0.0
        %685 = vmatprep.subr.mxu0 0.0
        %686 = vmatpush1.msra.mxu0 0.0
        %687 = vmatprep.subr.mxu0 0.0
        %688 = vmatpush1.msra.mxu0 0.0
        %689 = vmatprep.subr.mxu0 0.0
        %690 = vmatpush1.msra.mxu0 0.0
        %691 = vmatprep.subr.mxu0 0.0
        %692 = vmatpush1.msra.mxu0 0.0
        %693 = vmatprep.subr.mxu0 0.0
        %694 = vmatpush1.msra.mxu0 0.0
        %695 = vmatprep.subr.mxu0 0.0
        %696 = vmatpush1.msra.mxu0 0.0
        %697 = vmatprep.subr.mxu0 0.0
        %698 = vmatpush1.msra.mxu0 0.0
        %699 = vmatprep.subr.mxu0 0.0
        %700 = vmatpush1.msra.mxu0 0.0
        %701 = vmatprep.subr.mxu0 0.0
        %702 = vmatpush1.msra.mxu0 %v667
        %703 = vmatprep.subr.mxu0 0.0
        %704 = vmatpush2.msra.mxu0 0.0
        %705 = vmatprep.subr.mxu0 0.0
        %706 = vmatpush2.msra.mxu0 0.0
        %707 = vmatprep.subr.mxu0 0.0
        %708 = vmatpush2.msra.mxu0 0.0
        %709 = vmatprep.subr.mxu0 0.0
        %710 = vmatpush2.msra.mxu0 0.0
        %711 = vmatprep.subr.mxu0 0.0
        %712 = vmatpush2.msra.mxu0 0.0
        %713 = vmatprep.subr.mxu0 0.0
        %714 = vmatpush2.msra.mxu0 0.0
        %715 = vmatprep.subr.mxu0 0.0
        %716 = vmatpush2.msra.mxu0 0.0
        %717 = vmatprep.subr.mxu0 0.0
        %718 = vmatpush2.msra.mxu0 0.0
        %719 = vmatprep.subr.mxu0 0.0
        %720 = vmatpush2.msra.mxu0 0.0
        %721 = vmatprep.subr.mxu0 0.0
        %722 = vmatpush2.msra.mxu0 0.0
        %723 = vmatprep.subr.mxu0 0.0
        %724 = vmatpush2.msra.mxu0 0.0
        %725 = vmatprep.subr.mxu0 0.0
        %726 = vmatpush2.msra.mxu0 0.0
        %727 = vmatprep.subr.mxu0 0.0
        %728 = vmatpush2.msra.mxu0 0.0
        %729 = vmatprep.subr.mxu0 0.0
        %730 = vmatpush2.msra.mxu0 0.0
        %731 = vmatprep.subr.mxu0 0.0
        %732 = vmatpush2.msra.mxu0 0.0
        %733 = vmatprep.subr.mxu0 0.0
        %734 = vmatpush2.msra.mxu0 0.0
        %735 = vmatprep.mubr.f32.mxu0 0.0
        %736 = vmatmul.mubr.f32.gmra.mxu0 %v669
        %v737 = vpop.f32.mrf.mxu0
        %v738 = vadd.f32 0.0, %v737
        %v739 = vpop.f32.mrf.mxu0
        %740 = vdwg.mxu0
        %742 = vrot.lane.b32.xlu0 %v738, 32
        %v743 = vpop.permute.xlu0 %742
        %vm745 = vcmask 523520
        %746 = vst.msk [vmem:[%s385] sm:$0xff] %vm745, %v743
        %s747 = sand.u32 %s162, 1
        %s748 = scalar_lea.sflag [#allocation4], %s747
        %s749 = sand.u32 %s162, 1
        %s750 = smul.addr %s749, 8
        %s751 = scalar_lea.vmem [#allocation10], %s750
        %s752 = sand.u32 %s190, 1
        %s753 = scalar_lea.sflag [#allocation12], %s752
        %s754 = sand.u32 %s190, 1
        %s755 = smul.addr %s754, 16
        %s756 = scalar_lea.vmem [#allocation11], %s755
        // Predicated region
        $region53: #{tpu_custom_call.1} parent=35 // pred_check
          %p757 = pneg %p172
        $region54: #{tpu_custom_call.1} parent=35 // pred_check_branch
          %759 = sbr.rel (%p757) target = $region56
        $region55: #{tpu_custom_call.1} parent=35 // pred_region
          %s761 = ssub.s32 128, 128
          %762 = vsyncadd %s748, %s761
          %s763 = sadd.s32 %s37, %s36
          %s764 = smul.addr %s763, 128
          %s765 = scalar_lea.hbm %s4, %s764
          %s767 = sshll.u32 %s751, 4
          %s768 = int_to_ptr.vmem [resolvable:$true] %s767
          %770 = dma.vmem_to_hbm [thread:$0]  %s768, 128, %s765, %s748
        $region56: #{tpu_custom_call.1} parent=35 // pred_fallthru
          _
        // Predicated region
        $region57: #{tpu_custom_call.1} parent=35 // pred_check
          %p771 = pneg %p200
        $region58: #{tpu_custom_call.1} parent=35 // pred_check_branch
          %773 = sbr.rel (%p771) target = $region60
        $region59: #{tpu_custom_call.1} parent=35 // pred_region
          %s775 = ssub.s32 256, 256
          %776 = vsyncadd %s753, %s775
          %s777 = smul.addr %s36, 2
          %s778 = sadd.s32 %s37, %s777
          %s779 = smul.addr %s778, 128
          %s780 = scalar_lea.hbm %s5, %s779
          %s781 = sshll.u32 %s756, 4
          %s782 = int_to_ptr.vmem [resolvable:$true] %s781
          %787 = dma.vmem_to_hbm [thread:$0]  %s782, 256, %s780, %s753, 128, 128, 8
        $region60: #{tpu_custom_call.1} parent=35 // pred_fallthru
          _
      $region36: #{tpu_custom_call.1} parent=5 // pred_fallthru
        _
      %p788 = scmp.le.s32.totalorder 2, %s27
      // Predicated region
      $region61: #{tpu_custom_call.1} parent=5 // pred_check
        %p789 = pneg %p788
      $region62: #{tpu_custom_call.1} parent=5 // pred_check_branch
        %791 = sbr.rel (%p789) target = $region64
      $region63: #{tpu_custom_call.1} parent=5 // pred_region
        %s792 = ssub.s32 %s27, 2
        // Predicated region
        $region65: #{tpu_custom_call.1} parent=63 // pred_check
          %p793 = pneg %p178
        $region66: #{tpu_custom_call.1} parent=63 // pred_check_branch
          %795 = sbr.rel (%p793) target = $region68
        $region67: #{tpu_custom_call.1} parent=63 // pred_region
          %s796 = sand.u32 %s163, 1
          %s797 = scalar_lea.sflag [#allocation4], %s796
          %s798 = sand.u32 %s163, 1
          %s799 = smul.addr %s798, 8
          %s800 = scalar_lea.vmem [#allocation10], %s799
          %801 = dma.done %s797, 128
        $region68: #{tpu_custom_call.1} parent=63 // pred_fallthru
          _
        // Predicated region
        $region69: #{tpu_custom_call.1} parent=63 // pred_check
          %p802 = pneg %p206
        $region70: #{tpu_custom_call.1} parent=63 // pred_check_branch
          %804 = sbr.rel (%p802) target = $region72
        $region71: #{tpu_custom_call.1} parent=63 // pred_region
          %s805 = sand.u32 %s191, 1
          %s806 = scalar_lea.sflag [#allocation12], %s805
          %s807 = sand.u32 %s191, 1
          %s808 = smul.addr %s807, 16
          %s809 = scalar_lea.vmem [#allocation11], %s808
          %810 = dma.done %s806, 256
        $region72: #{tpu_custom_call.1} parent=63 // pred_fallthru
          _
      $region64: #{tpu_custom_call.1} parent=5 // pred_fallthru
        _
    $region6: #{tpu_custom_call.1} parent=1 // loop_footer
      %s31 = sadd.s32 1, %s27
    $region7: #{tpu_custom_call.1} parent=1 // loop_footer_branch
      %26 = sbr.rel target = $region3
    $region8: #{tpu_custom_call.1} parent=1 // loop_exit
      _
    %811 = vsyncpa [#allocation3], 1
    %s812 = scalar_lea.sflag [#allocation3], 1
    %813 = vsyncpa %s812, 1
    %814 = vsyncpa [#allocation6], 1
    %s815 = scalar_lea.sflag [#allocation6], 1
    %816 = vsyncpa %s815, 1
    %817 = vsyncpa [#allocation9], 1
    %s818 = scalar_lea.sflag [#allocation9], 1
    %819 = vsyncpa %s818, 1
    %820 = vsyncpa [#allocation4], 1
    %s821 = scalar_lea.sflag [#allocation4], 1
    %822 = vsyncpa %s821, 1
    %823 = vsyncpa [#allocation12], 1
    %s824 = scalar_lea.sflag [#allocation12], 1
    %825 = vsyncpa %s824, 1

</llo_original>
